<compile_context>
chip_gen: v7x
topology: tpu7x:2x2x1
jax: 0.10.0
libtpu: 0.0.40
codegen_flags: <defaults>
</compile_context>

<pallas_src>
import functools

import jax
import jax.numpy as jnp
from jax.experimental import pallas as pl
from jax.experimental.pallas import tpu as pltpu

LANES = 128            # vreg lane width
MAX_TILE_ROWS = 8192   # 8192 * 128 * 4B = 4 MiB f32 HBM block per input per step
CHUNK_ROWS = 64        # inner compute chunk: 8 f32 vregs per operand
VMEM_LIMIT_BYTES = 48 * 1024 * 1024  # > 2 inputs x 2 bufs x 4 MiB; < v7x's 64 MiB


def _num_tensorcores():
    """2 TensorCores per chip on v7x, 1 on v5e/v6e."""
    try:
        kind = jax.devices()[0].device_kind.lower()
    except Exception:
        return 1
    return 2 if ("v7" in kind or "7x" in kind) else 1


def _focal_loss_kernel(x_ref, t_ref, o_ref, acc_ref, *, gamma, tile_rows,
                       k_steps, full_rows, rem_lanes, first_masked_block,
                       binary_targets):
    i = pl.program_id(0)          # core index (leading "parallel" axis)
    k = pl.program_id(1)          # reduction step within this core's block range

    @pl.when(k == 0)
    def _():
        acc_ref[...] = jnp.zeros_like(acc_ref)

    block_id = i * k_steps + k            # true (unclamped) block index
    row0 = block_id * tile_rows           # global row of this block's first row

    n_main = tile_rows // CHUNK_ROWS
    tail_rows = tile_rows % CHUNK_ROWS

    def loss_chunk(r0, nrows, masked):
        x = x_ref[pl.ds(r0, nrows), :].astype(jnp.float32)
        t = t_ref[pl.ds(r0, nrows), :].astype(jnp.float32)
        valid = None
        if masked:
            # Row-granular compare keeps this int32-safe even for huge inputs.
            grow = row0 + r0 + jax.lax.broadcasted_iota(jnp.int32, (nrows, LANES), 0)
            if rem_lanes:
                lane = jax.lax.broadcasted_iota(jnp.int32, (nrows, LANES), 1)
                valid = (grow < full_rows) | ((grow == full_rows) & (lane < rem_lanes))
            else:
                valid = grow < full_rows
            # Zero out-of-range lanes BEFORE the exp/log chain so DMA garbage
            # can never produce NaN/Inf that survives the final where().
            x = jnp.where(valid, x, 0.0)
            t = jnp.where(valid, t, 0.0)

        # Numerically stable BCE-with-logits reproducing PyTorch's
        # binary_cross_entropy(sigmoid(x), t) with its -100 log clamp:
        #   log(sigmoid(x)) = x - softplus(x),  log(1 - sigmoid(x)) = -softplus(x)
        e = jnp.exp(-jnp.abs(x))
        sp = jnp.maximum(x, 0.0) + jnp.log(1.0 + e)
        log_p = jnp.maximum(x - sp, -100.0)
        log_1mp = jnp.maximum(-sp, -100.0)
        bce = -(t * log_p + (1.0 - t) * log_1mp)

        if binary_targets:
            # Opt-in {0,1}-target fast path: one fewer EUP exp.
            inv = pl.reciprocal(1.0 + e, approx=True)
            p = jnp.where(x >= 0.0, inv, e * inv)      # sigmoid(x)
            pt = t * p + (1.0 - t) * (1.0 - p)
        else:
            pt = jnp.exp(-bce)                          # exact for soft targets too

        omp = 1.0 - pt
        g = float(gamma)
        if g == 2.0:
            focal = omp * omp                           # VPU square, no pow
        elif g == int(g) and 0 <= int(g) <= 8:
            focal = jnp.ones_like(omp)
            for _ in range(int(g)):
                focal = focal * omp
        else:
            # Guard omp == 0 so pow -> exp(g*log(omp)) cannot produce NaN.
            safe = jnp.where(omp > 0.0, omp, 1.0)
            focal = jnp.where(omp > 0.0, safe ** jnp.float32(g), 0.0)

        f = focal * bce
        if masked:
            f = jnp.where(valid, f, 0.0)
        return f

    def fold8(f, nrows):
        # (nrows,128) -> (8,128) with pure VPU vreg adds (no cross-lane work).
        return jnp.sum(f.reshape(nrows // 8, 8, LANES), axis=0)

    def run_chunks(masked):
        if n_main > 0:
            def body(c, acc):
                r0 = pl.multiple_of(c * CHUNK_ROWS, CHUNK_ROWS)
                return acc + fold8(loss_chunk(r0, CHUNK_ROWS, masked), CHUNK_ROWS)
            part = jax.lax.fori_loop(0, n_main, body,
                                     jnp.zeros((8, LANES), jnp.float32),
                                     unroll=(n_main <= 4))
            acc_ref[...] += part
        if tail_rows:
            f = loss_chunk(n_main * CHUNK_ROWS, tail_rows, masked)
            if tail_rows % 8 == 0:
                acc_ref[...] += fold8(f, tail_rows)
            else:
                acc_ref[0:1, :] = acc_ref[0:1, :] + jnp.sum(f, axis=0, keepdims=True)

    if first_masked_block is None:
        run_chunks(False)              # exactly divisible: mask-free kernel
    elif first_masked_block <= 0:
        run_chunks(True)               # single (ragged) block
    else:
        @pl.when(block_id < first_masked_block)
        def _():
            run_chunks(False)

        @pl.when(block_id >= first_masked_block)
        def _():
            run_chunks(True)

    @pl.when(k == k_steps - 1)
    def _():
        o_ref[0] = acc_ref[...]


def focal_loss(inputs, targets, alpha=1.0, gamma=2.0, binary_targets=False):
    """Pallas TPU implementation of FocalLoss.forward (returns a scalar)."""
    assert inputs.shape == targets.shape
    total = int(inputs.size)
    assert total > 0

    x = jnp.reshape(inputs, (-1,))
    t = jnp.reshape(targets, (-1,))
    if t.dtype == jnp.bool_:
        t = t.astype(x.dtype)

    rem = total % LANES
    if rem:
        # TODO(synk): a 1-D tail epilogue would avoid even this tiny-pad copy
        # when numel % 128 != 0; tile-level raggedness is handled in-kernel.
        x = jnp.pad(x, (0, LANES - rem))
        t = jnp.pad(t, (0, LANES - rem))

    rows = x.size // LANES                   # == cdiv(total, 128)
    x2 = x.reshape(rows, LANES)
    t2 = t.reshape(rows, LANES)

    # Multiple of CHUNK_ROWS when rows >= MAX_TILE_ROWS, else the full row dim
    # (a full-dim block is always legal regardless of the (8,128) rule).
    tile_rows = min(MAX_TILE_ROWS, rows)
    num_blocks = -(-rows // tile_rows)
    ncores = max(1, min(_num_tensorcores(), num_blocks))
    k_steps = -(-num_blocks // ncores)

    has_ragged = total < num_blocks * tile_rows * LANES
    has_dup = ncores * k_steps > num_blocks   # odd split: core 1 revisits a block
    if has_ragged:
        first_masked = num_blocks - 1
    elif has_dup:
        first_masked = num_blocks
    else:
        first_masked = None

    if has_dup:
        def in_index(i, k):
            return (jnp.minimum(i * k_steps + k, num_blocks - 1), 0)
    else:
        def in_index(i, k):
            return (i * k_steps + k, 0)

    in_spec = pl.BlockSpec((tile_rows, LANES), in_index)

    kernel = functools.partial(
        _focal_loss_kernel,
        gamma=float(gamma),
        tile_rows=tile_rows,
        k_steps=k_steps,
        full_rows=total // LANES,
        rem_lanes=total % LANES,
        first_masked_block=first_masked,
        binary_targets=bool(binary_targets),
    )

    # TODO(synk): on v7x, verify in xprof that the leading "parallel" axis really
    # shards across both TensorCores; if not, switch it to pltpu.CORE_PARALLEL.
    partials = pl.pallas_call(
        kernel,
        out_shape=jax.ShapeDtypeStruct((ncores, 8, LANES), jnp.float32),
        grid_spec=pltpu.PrefetchScalarGridSpec(
            num_scalar_prefetch=0,
            grid=(ncores, k_steps),
            in_specs=[in_spec, in_spec],
            out_specs=pl.BlockSpec((1, 8, LANES), lambda i, k: (i, 0, 0)),
            scratch_shapes=[pltpu.VMEM((8, LANES), jnp.float32)],
        ),
        compiler_params=pltpu.CompilerParams(
            dimension_semantics=("parallel", "arbitrary"),
            vmem_limit_bytes=VMEM_LIMIT_BYTES,
        ),
    )(x2, t2)

    # Single cross-lane reduction + hoisted alpha and mean normalization.
    return jnp.float32(alpha) * (jnp.sum(partials) / jnp.float32(total))


def _reference_focal_loss(inputs, targets, alpha=1.0, gamma=2.0):
    # Mirrors the PyTorch module: sigmoid -> BCE (log clamped at -100) -> focal.
    p = jax.nn.sigmoid(inputs.astype(jnp.float32))
    t = targets.astype(jnp.float32)
    log_p = jnp.maximum(jnp.log(p), -100.0)
    log_1mp = jnp.maximum(jnp.log(1.0 - p), -100.0)
    bce = -(t * log_p + (1.0 - t) * log_1mp)
    pt = jnp.exp(-bce)
    return jnp.mean(alpha * (1.0 - pt) ** gamma * bce)


if __name__ == "__main__":
    key = jax.random.PRNGKey(0)
    k1, k2, k3, k4 = jax.random.split(key, 4)

    # Small NCHW-shaped logits and binary targets (per-pixel mask logits).
    x = jax.random.normal(k1, (2, 4, 16, 16), dtype=jnp.float32)
    y = (jax.random.uniform(k2, (2, 4, 16, 16)) > 0.5).astype(jnp.float32)

    loss = focal_loss(x, y, alpha=1.0, gamma=2.0)
    jax.block_until_ready(loss)
    ref = _reference_focal_loss(x, y, alpha=1.0, gamma=2.0)
    assert jnp.allclose(loss, ref, atol=1e-5, rtol=1e-5), (loss, ref)

    # Ragged size (numel % 128 != 0) exercises the in-kernel masked tail path.
    x2 = jax.random.normal(k3, (3, 5, 7), dtype=jnp.float32)
    y2 = (jax.random.uniform(k4, (3, 5, 7)) > 0.5).astype(jnp.float32)
    loss2 = focal_loss(x2, y2, alpha=0.25, gamma=2.0)
    jax.block_until_ready(loss2)
    ref2 = _reference_focal_loss(x2, y2, alpha=0.25, gamma=2.0)
    assert jnp.allclose(loss2, ref2, atol=1e-5, rtol=1e-5), (loss2, ref2)

    print("KERNEL_OK")
</pallas_src>

<mosaic_0001>
module attributes {stable_mosaic.version = 11 : i64} {
  func.func @_focal_loss_kernel(%arg0: i32, %arg1: i32, %arg2: memref<16x128xf32, #tpu.memory_space<vmem>>, %arg3: memref<16x128xf32, #tpu.memory_space<vmem>>, %arg4: memref<1x8x128xf32, #tpu.memory_space<vmem>>, %arg5: memref<8x128xf32, #tpu.memory_space<vmem>>) attributes {dimension_semantics = [#tpu.dimension_semantics<parallel>, #tpu.dimension_semantics<arbitrary>], iteration_bounds = array<i64: 1, 1>, scalar_prefetch = 0 : i64, scratch_operands = 1 : i64, tpu.core_type = #tpu.core_type<tc>, window_params = [{transform_indices = @transform_0, window_bounds = array<i64: 16, 128>}, {transform_indices = @transform_1, window_bounds = array<i64: 16, 128>}, {transform_indices = @transform_2, window_bounds = array<i64: 1, 8, 128>}]} {
    %c0_i32 = arith.constant 0 : i32
    %0 = arith.cmpi eq, %arg1, %c0_i32 : i32
    %1 = arith.extui %0 : i1 to i32
    %c0_i32_0 = arith.constant 0 : i32
    %2 = arith.cmpi ne, %1, %c0_i32_0 : i32
    scf.if %2 {
      %cst_20 = arith.constant 0.000000e+00 : f32
      %44 = vector.broadcast %cst_20 : f32 to vector<8x128xf32>
      %c0_21 = arith.constant 0 : index
      %c0_22 = arith.constant 0 : index
      %45 = vector.load %arg5[%c0_21, %c0_22] : memref<8x128xf32, #tpu.memory_space<vmem>>, vector<8x128xf32>
      tpu.vector_store %arg5[%c0_21, %c0_22], %44 {strides = array<i32>} : memref<8x128xf32, #tpu.memory_space<vmem>>, vector<8x128xf32>,
    } else {
    }
    %c0 = arith.constant 0 : index
    %c0_1 = arith.constant 0 : index
    %3 = vector.load %arg2[%c0, %c0_1] : memref<16x128xf32, #tpu.memory_space<vmem>>, vector<16x128xf32>
    %c0_2 = arith.constant 0 : index
    %c0_3 = arith.constant 0 : index
    %4 = vector.load %arg3[%c0_2, %c0_3] : memref<16x128xf32, #tpu.memory_space<vmem>>, vector<16x128xf32>
    %5 = math.absf %3 : vector<16x128xf32>
    %cst = arith.constant 0.000000e+00 : f32
    %6 = vector.broadcast %cst : f32 to vector<16x128xf32>
    %7 = arith.subf %6, %5 : vector<16x128xf32>
    %8 = math.exp %7 : vector<16x128xf32>
    %cst_4 = arith.constant 0.000000e+00 : f32
    %9 = vector.broadcast %cst_4 : f32 to vector<16x128xf32>
    %10 = arith.maximumf %3, %9 : vector<16x128xf32>
    %cst_5 = arith.constant 1.000000e+00 : f32
    %11 = vector.broadcast %cst_5 : f32 to vector<16x128xf32>
    %12 = arith.addf %11, %8 : vector<16x128xf32>
    %13 = math.log %12 : vector<16x128xf32>
    %14 = arith.addf %10, %13 : vector<16x128xf32>
    %15 = arith.subf %3, %14 : vector<16x128xf32>
    %cst_6 = arith.constant -1.000000e+02 : f32
    %16 = vector.broadcast %cst_6 : f32 to vector<16x128xf32>
    %17 = arith.maximumf %15, %16 : vector<16x128xf32>
    %cst_7 = arith.constant 0.000000e+00 : f32
    %18 = vector.broadcast %cst_7 : f32 to vector<16x128xf32>
    %19 = arith.subf %18, %14 : vector<16x128xf32>
    %cst_8 = arith.constant -1.000000e+02 : f32
    %20 = vector.broadcast %cst_8 : f32 to vector<16x128xf32>
    %21 = arith.maximumf %19, %20 : vector<16x128xf32>
    %22 = arith.mulf %4, %17 : vector<16x128xf32>
    %cst_9 = arith.constant 1.000000e+00 : f32
    %23 = vector.broadcast %cst_9 : f32 to vector<16x128xf32>
    %24 = arith.subf %23, %4 : vector<16x128xf32>
    %25 = arith.mulf %24, %21 : vector<16x128xf32>
    %26 = arith.addf %22, %25 : vector<16x128xf32>
    %cst_10 = arith.constant 0.000000e+00 : f32
    %27 = vector.broadcast %cst_10 : f32 to vector<16x128xf32>
    %28 = arith.subf %27, %26 : vector<16x128xf32>
    %cst_11 = arith.constant 0.000000e+00 : f32
    %29 = vector.broadcast %cst_11 : f32 to vector<16x128xf32>
    %30 = arith.subf %29, %28 : vector<16x128xf32>
    %31 = math.exp %30 : vector<16x128xf32>
    %cst_12 = arith.constant 1.000000e+00 : f32
    %32 = vector.broadcast %cst_12 : f32 to vector<16x128xf32>
    %33 = arith.subf %32, %31 : vector<16x128xf32>
    %34 = arith.mulf %33, %33 : vector<16x128xf32>
    %35 = arith.mulf %34, %28 : vector<16x128xf32>
    %c0_13 = arith.constant 0 : index
    %c0_14 = arith.constant 0 : index
    %36 = vector.load %arg5[%c0_13, %c0_14] : memref<8x128xf32, #tpu.memory_space<vmem>>, vector<8x128xf32>
    %37 = vector.shape_cast %35 : vector<16x128xf32> to vector<2x8x128xf32>
    %cst_15 = arith.constant dense<0.000000e+00> : vector<8x128xf32>
    %38 = vector.multi_reduction <add>, %37, %cst_15 [0] : vector<2x8x128xf32> to vector<8x128xf32>
    %39 = arith.addf %36, %38 : vector<8x128xf32>
    %c0_16 = arith.constant 0 : index
    %c0_17 = arith.constant 0 : index
    %40 = vector.load %arg5[%c0_16, %c0_17] : memref<8x128xf32, #tpu.memory_space<vmem>>, vector<8x128xf32>
    tpu.vector_store %arg5[%c0_16, %c0_17], %39 {strides = array<i32>} : memref<8x128xf32, #tpu.memory_space<vmem>>, vector<8x128xf32>,
    %c0_i32_18 = arith.constant 0 : i32
    %41 = arith.cmpi eq, %arg1, %c0_i32_18 : i32
    %42 = arith.extui %41 : i1 to i32
    %c0_i32_19 = arith.constant 0 : i32
    %43 = arith.cmpi ne, %42, %c0_i32_19 : i32
    scf.if %43 {
      %c0_20 = arith.constant 0 : index
      %c0_21 = arith.constant 0 : index
      %44 = vector.load %arg5[%c0_20, %c0_21] : memref<8x128xf32, #tpu.memory_space<vmem>>, vector<8x128xf32>
      %c0_22 = arith.constant 0 : index
      %c0_23 = arith.constant 0 : index
      %c0_24 = arith.constant 0 : index
      %45 = vector.load %arg4[%c0_22, %c0_23, %c0_24] : memref<1x8x128xf32, #tpu.memory_space<vmem>>, vector<1x8x128xf32>
      %46 = vector.shape_cast %45 : vector<1x8x128xf32> to vector<8x128xf32>
      %47 = vector.shape_cast %44 : vector<8x128xf32> to vector<1x8x128xf32>
      tpu.vector_store %arg4[%c0_22, %c0_23, %c0_24], %47 {strides = array<i32>} : memref<1x8x128xf32, #tpu.memory_space<vmem>>, vector<1x8x128xf32>,
    } else {
    }
    return
  }
  func.func @transform_0(%arg0: i32, %arg1: i32) -> (i32, i32) {
    %c1_i32 = arith.constant 1 : i32
    %0 = arith.muli %arg0, %c1_i32 : i32
    %1 = arith.addi %0, %arg1 : i32
    %c0_i32 = arith.constant 0 : i32
    %c0_i32_0 = arith.constant 0 : i32
    return %1, %c0_i32 : i32, i32
  }
  func.func @transform_1(%arg0: i32, %arg1: i32) -> (i32, i32) {
    %c1_i32 = arith.constant 1 : i32
    %0 = arith.muli %arg0, %c1_i32 : i32
    %1 = arith.addi %0, %arg1 : i32
    %c0_i32 = arith.constant 0 : i32
    %c0_i32_0 = arith.constant 0 : i32
    return %1, %c0_i32 : i32, i32
  }
  func.func @transform_2(%arg0: i32, %arg1: i32) -> (i32, i32, i32) {
    %c0_i32 = arith.constant 0 : i32
    %c0_i32_0 = arith.constant 0 : i32
    %c0_i32_1 = arith.constant 0 : i32
    return %arg0, %c0_i32, %c0_i32_0 : i32, i32, i32
  }
}

</mosaic_0001>

<llo_original>
// kernel: tpu_custom_call.1
$region0: #{tpu_custom_call.1}
  #allocation0 [shape = 'u32[]', space=smem, size = 0x4, offset = 0x4, fixed_abs, tag = 'smem constant byte address 0x4 - core index']
  #allocation1 [shape = 'u32[144,128]{1,0:T(1,128)}', space=vmem, size = 0x12000, scoped, tag = 'internal scratch']
  #allocation2 [shape = 'f32[8,128]{1,0:T(8,128)}', space=vmem, size = 0x1000, scoped, tag = 'scratch operand']
  %s0 = inlined_call_operand.hbm [shape: f32[16,128], index: 0, kind: input, shape index: {}]
  %s1 = inlined_call_operand.hbm [shape: f32[16,128], index: 1, kind: input, shape index: {}]
  %s2 = inlined_call_operand.hbm [shape: f32[1,8,128], index: 2, kind: output, shape index: {}]
  %s3 = sld [smem:[#allocation0]]
  $region34: #{tpu_custom_call.1} parent=0
    _
  %s5 = ssub.s32 1, %s3
  %s6 = scalar_select 0, %s5, %s3
  $region1: #{tpu_custom_call.1} parent=0
    #allocation3 [shape = 'u8[8192]{0}', space=vmem, size = 0x2000, scoped, tag = 'input window, operand 0, single buffered']
    #allocation4 [shape = 's32[1]{0}', space=sflag, size = 0x4, scoped, tag = 'scoped memory for tpu_custom_call.1']
    #allocation5 [shape = 's32[1]{0}', space=sflag, size = 0x4, scoped, tag = 'scoped memory for tpu_custom_call.1']
    #allocation6 [shape = 'u8[8192]{0}', space=vmem, size = 0x2000, scoped, tag = 'input window, operand 1, single buffered']
    #allocation7 [shape = 's32[1]{0}', space=sflag, size = 0x4, scoped, tag = 'scoped memory for tpu_custom_call.1']
    #allocation8 [shape = 'u8[4096]{0}', space=vmem, size = 0x1000, scoped, tag = 'output window, operand 0, single buffered']
    %7 = vsyncpa [#allocation4], 0
    %8 = vsyncpa [#allocation7], 0
    %9 = vsyncpa [#allocation5], 0
    // Predicated region
    $region2: #{tpu_custom_call.1} parent=1 // pred_check
      _
    $region3: #{tpu_custom_call.1} parent=1 // pred_check_branch
      %11 = sbr.rel (0) target = $region5
    $region4: #{tpu_custom_call.1} parent=1 // pred_region
      %s12 = sadd.s32 0, 0
      %s13 = smul.u32 2, %s12
      %s15 = ssub.s32 256, 256
      %16 = vsyncadd [#allocation4], %s15
      %s17 = smul.addr %s13, 128
      %s18 = scalar_lea.hbm %s0, %s17
      %s19 = sshll.u32 [#allocation3], 4
      %s20 = int_to_ptr.vmem [resolvable:$true] %s19
      %25 = dma.hbm_to_vmem [thread:$0]  %s18, 256, %s20, [#allocation4], 128, 128, 8
    $region5: #{tpu_custom_call.1} parent=1 // pred_fallthru
      _
    // Predicated region
    $region6: #{tpu_custom_call.1} parent=1 // pred_check
      _
    $region7: #{tpu_custom_call.1} parent=1 // pred_check_branch
      %27 = sbr.rel (0) target = $region9
    $region8: #{tpu_custom_call.1} parent=1 // pred_region
      %s28 = sadd.s32 0, 0
      %s29 = smul.u32 2, %s28
      %s31 = ssub.s32 256, 256
      %32 = vsyncadd [#allocation7], %s31
      %s33 = smul.addr %s29, 128
      %s34 = scalar_lea.hbm %s1, %s33
      %s35 = sshll.u32 [#allocation6], 4
      %s36 = int_to_ptr.vmem [resolvable:$true] %s35
      %41 = dma.hbm_to_vmem [thread:$0]  %s34, 256, %s36, [#allocation7], 128, 128, 8
    $region9: #{tpu_custom_call.1} parent=1 // pred_fallthru
      _
    // Predicated region
    $region10: #{tpu_custom_call.1} parent=1 // pred_check
      _
    $region11: #{tpu_custom_call.1} parent=1 // pred_check_branch
      %43 = sbr.rel (0) target = $region13
    $region12: #{tpu_custom_call.1} parent=1 // pred_region
      %44 = dma.done [#allocation4], 256
    $region13: #{tpu_custom_call.1} parent=1 // pred_fallthru
      _
    // Predicated region
    $region14: #{tpu_custom_call.1} parent=1 // pred_check
      _
    $region15: #{tpu_custom_call.1} parent=1 // pred_check_branch
      %46 = sbr.rel (0) target = $region17
    $region16: #{tpu_custom_call.1} parent=1 // pred_region
      %47 = dma.done [#allocation7], 256
    $region17: #{tpu_custom_call.1} parent=1 // pred_fallthru
      _
    %s48 = sadd.s32 0, 0
    %s49 = smul.u32 2, %s48
    %s50 = sadd.s32 0, 0
    %s51 = smul.u32 2, %s50
    %p52 = scmp.eq.s32.totalorder 0, 0
    // Predicated region
    $region18: #{tpu_custom_call.1} parent=1 // pred_check
      %p53 = pneg %p52
    $region19: #{tpu_custom_call.1} parent=1 // pred_check_branch
      %55 = sbr.rel (%p53) target = $region21
    $region20: #{tpu_custom_call.1} parent=1 // pred_region
      %56 = vst [vmem:[#allocation2] sm:$0xff] 0.0
    $region21: #{tpu_custom_call.1} parent=1 // pred_fallthru
      _
    %v57 = vld [vmem:[#allocation3] sm:$0xff]
    %v58 = vld [vmem:[#allocation3 + $0x8] sm:$0xff]
    %v59 = vld [vmem:[#allocation6] sm:$0xff]
    %v60 = vld [vmem:[#allocation6 + $0x8] sm:$0xff]
    %v61 = vand.u32 2147483647, %v57
    %v62 = vand.u32 2147483647, %v58
    %v63 = vsub.f32 0.0, %v61
    %v64 = vsub.f32 0.0, %v62
    %v65 = vmul.f32 %v63, 1.442695
    %v66 = vpow.pop %v65
    %v67 = vmul.f32 %v64, 1.442695
    %v68 = vpow.pop %v67
    %v69 = vmax.f32 %v57, 0.0
    %v70 = vmax.f32 %v58, 0.0
    %v71 = vadd.f32 %v66, 1.0
    %v72 = vadd.f32 %v68, 1.0
    %v73 = vlog2.pop %v71
    %v74 = vmul.f32 %v73, 0.6931472
    %v75 = vlog2.pop %v72
    %v76 = vmul.f32 %v75, 0.6931472
    %v77 = vadd.f32 %v69, %v74
    %v78 = vadd.f32 %v70, %v76
    %v79 = vsub.f32 %v57, %v77
    %v80 = vsub.f32 %v58, %v78
    %v81 = vmax.f32 %v79, -100.0
    %v82 = vmax.f32 %v80, -100.0
    %v83 = vsub.f32 0.0, %v77
    %v84 = vsub.f32 0.0, %v78
    %v85 = vmax.f32 %v83, -100.0
    %v86 = vmax.f32 %v84, -100.0
    %v87 = vmul.f32 %v59, %v81
    %v88 = vmul.f32 %v60, %v82
    %v89 = vsub.f32 1.0, %v59
    %v90 = vsub.f32 1.0, %v60
    %v91 = vmul.f32 %v89, %v85
    %v92 = vmul.f32 %v90, %v86
    %v93 = vadd.f32 %v87, %v91
    %v94 = vadd.f32 %v88, %v92
    %v95 = vsub.f32 0.0, %v93
    %v96 = vsub.f32 0.0, %v94
    %v97 = vsub.f32 0.0, %v95
    %v98 = vsub.f32 0.0, %v96
    %v99 = vmul.f32 %v97, 1.442695
    %v100 = vpow.pop %v99
    %v101 = vmul.f32 %v98, 1.442695
    %v102 = vpow.pop %v101
    %v103 = vsub.f32 1.0, %v100
    %v104 = vsub.f32 1.0, %v102
    %v105 = vmul.f32 %v103, %v103
    %v106 = vmul.f32 %v104, %v104
    %v107 = vmul.f32 %v105, %v95
    %v108 = vmul.f32 %v106, %v96
    %v109 = vld [vmem:[#allocation2] sm:$0xff]
    %v110 = vadd.f32 %v107, %v108
    %v111 = vadd.f32 %v109, %v110
    %112 = vst [vmem:[#allocation2] sm:$0xff] %v111
    // Predicated region
    $region22: #{tpu_custom_call.1} parent=1 // pred_check
      %p113 = pneg %p52
    $region23: #{tpu_custom_call.1} parent=1 // pred_check_branch
      %115 = sbr.rel (%p113) target = $region25
    $region24: #{tpu_custom_call.1} parent=1 // pred_region
      %v116 = vld [vmem:[#allocation2] sm:$0xff]
      %117 = vst [vmem:[#allocation8] sm:$0xff] %v116
    $region25: #{tpu_custom_call.1} parent=1 // pred_fallthru
      _
    // Predicated region
    $region26: #{tpu_custom_call.1} parent=1 // pred_check
      _
    $region27: #{tpu_custom_call.1} parent=1 // pred_check_branch
      %119 = sbr.rel (0) target = $region29
    $region28: #{tpu_custom_call.1} parent=1 // pred_region
      %s121 = ssub.s32 128, 128
      %122 = vsyncadd [#allocation5], %s121
      %s124 = sshll.u32 [#allocation8], 4
      %s125 = int_to_ptr.vmem [resolvable:$true] %s124
      %127 = dma.vmem_to_hbm [thread:$0]  %s125, 128, %s2, [#allocation5]
    $region29: #{tpu_custom_call.1} parent=1 // pred_fallthru
      _
    // Predicated region
    $region30: #{tpu_custom_call.1} parent=1 // pred_check
      _
    $region31: #{tpu_custom_call.1} parent=1 // pred_check_branch
      %129 = sbr.rel (0) target = $region33
    $region32: #{tpu_custom_call.1} parent=1 // pred_region
      %130 = dma.done [#allocation5], 128
    $region33: #{tpu_custom_call.1} parent=1 // pred_fallthru
      _
    %131 = vsyncpa [#allocation4], 1
    %132 = vsyncpa [#allocation7], 1
    %133 = vsyncpa [#allocation5], 1

</llo_original>
